<compile_context>
chip_gen: v5e
topology: v5e:2x2
jax: 0.10.0
libtpu: 0.0.40
codegen_flags: <defaults>
</compile_context>

<pallas_src>
import jax
import jax.numpy as jnp
from jax import lax
from jax.experimental import pallas as pl
from jax.experimental.pallas import tpu as pltpu


def _make_dense_relu_kernel(k_rem, use_scratch):
    """Builds the kernel body.

    k_rem:        K % tk (0 if the reduction axis divides evenly).
    use_scratch:  True -> accumulate in an f32 VMEM scratch (narrow out dtype),
                  False -> accumulate directly into the (f32) output block.
    """

    def kernel(x_ref, w_ref, b_ref, o_ref, *scratch):
        acc_ref = scratch[0] if use_scratch else o_ref
        k = pl.program_id(2)
        nk = pl.num_programs(2)

        @pl.when(k == 0)
        def _():
            acc_ref[...] = jnp.zeros_like(acc_ref)

        x = x_ref[...]   # [tm, tk]
        w = w_ref[...]   # [tn, tk]  (PyTorch [out, in] layout, untransposed)

        if k_rem:
            # Ragged last K block: zero the padded lanes of BOTH operands so
            # stale VMEM garbage (possibly NaN) cannot leak into the sum.
            valid = jnp.where(k == nk - 1, k_rem, x.shape[1])
            xcol = lax.broadcasted_iota(jnp.int32, x.shape, 1)
            wcol = lax.broadcasted_iota(jnp.int32, w.shape, 1)
            x = jnp.where(xcol < valid, x, jnp.zeros_like(x))
            w = jnp.where(wcol < valid, w, jnp.zeros_like(w))

        # Contract x dim 1 with weight dim 1 -> [tm, tn]; MXU handles the
        # transposed-RHS contraction, accumulation in f32.
        acc_ref[...] += lax.dot_general(
            x, w,
            dimension_numbers=(((1,), (1,)), ((), ())),
            preferred_element_type=jnp.float32)

        @pl.when(k == nk - 1)
        def _():
            acc = acc_ref[...] + b_ref[...].astype(jnp.float32)
            o_ref[...] = jnp.maximum(acc, 0.0).astype(o_ref.dtype)

    return kernel


def _vmem_capacity_bytes():
    """Per-core VMEM capacity; conservative (v7x-sized) fallback."""
    try:
        info = pltpu.get_tpu_info()
        cap = getattr(info, "vmem_capacity_bytes", None)
        if cap:
            return int(cap)
    except Exception:
        pass
    return 64 * 1024 * 1024


def _tile_vmem_bytes(tm, tn, tk, x_b, w_b, b_b, o_b, use_scratch):
    """Dtype-correct VMEM footprint: double-buffered inputs + output (+ acc)."""
    return (2 * (tm * tk * x_b + tn * tk * w_b + tn * b_b)
            + 2 * tm * tn * o_b
            + (tm * tn * 4 if use_scratch else 0))


def _choose_tiles(B, K, N, x_b, w_b, b_b, o_b, use_scratch, budget,
                  pref_tm=512, pref_tn=2048, pref_tk=512):
    # Full-extent blocks for small dims (always legal); otherwise aligned
    # tiles (tm % 8 == 0, tn/tk % 128 == 0).
    tm = B if B <= pref_tm else pref_tm
    tn = N if N <= pref_tn else pref_tn
    tk = K if K <= pref_tk else pref_tk

    # Megacore (v7x): make sure the parallel grid (i*j blocks) has >= 2 blocks
    # when feasible so both TensorCores get work.  Harmless on 1-TC chips.
    if pl.cdiv(B, tm) * pl.cdiv(N, tn) < 2:
        if N >= 256:
            tn = 128 * pl.cdiv(N, 256)      # -> >= 2 j blocks, lane aligned
        elif B >= 16:
            tm = 8 * pl.cdiv(B, 16)         # -> >= 2 i blocks, sublane aligned

    # Shrink tn, then tm, then tk until the footprint fits the VMEM budget.
    while _tile_vmem_bytes(tm, tn, tk, x_b, w_b, b_b, o_b, use_scratch) > budget:
        if tn > 512 and (tn // 2) % 128 == 0:
            tn //= 2
        elif tm > 256 and (tm // 2) % 8 == 0:
            tm //= 2
        elif tk > 256 and (tk // 2) % 128 == 0:
            tk //= 2
        else:
            break
    return tm, tn, tk


def base_dense_module(x, weight, bias, *, compute_dtype=None):
    """Forward of BaseDenseModule: ReLU(x @ weight.T + bias).

    x:      [B, latent]
    weight: [latent, latent]   (PyTorch Linear convention: [out_features, in_features])
    bias:   [latent]
    compute_dtype: optionally cast x/weight (e.g. jnp.bfloat16) to halve HBM
      traffic; accumulation/epilogue stay f32 and the output keeps x's dtype.
    """
    B, K = x.shape
    N = weight.shape[0]
    assert weight.shape == (N, K) and bias.shape == (N,)

    out_dtype = x.dtype
    if compute_dtype is not None:
        x = x.astype(compute_dtype)
        weight = weight.astype(compute_dtype)

    use_scratch = jnp.dtype(out_dtype) != jnp.dtype(jnp.float32)

    x_b = jnp.dtype(x.dtype).itemsize
    w_b = jnp.dtype(weight.dtype).itemsize
    b_b = jnp.dtype(bias.dtype).itemsize
    o_b = jnp.dtype(out_dtype).itemsize

    # ~25% headroom below physical VMEM for Mosaic internal scratch:
    # 128 MiB chips -> ~96 MiB budget, 64 MiB (v7x) -> ~48 MiB budget.
    budget = int(0.75 * _vmem_capacity_bytes())

    tm, tn, tk = _choose_tiles(B, K, N, x_b, w_b, b_b, o_b, use_scratch, budget)
    k_rem = K % tk if tk < K else 0

    grid = (pl.cdiv(B, tm), pl.cdiv(N, tn), pl.cdiv(K, tk))
    b2 = bias.reshape(1, N)  # 2-D for a TPU-friendly (sublane, lane) layout

    est = _tile_vmem_bytes(tm, tn, tk, x_b, w_b, b_b, o_b, use_scratch)
    vmem_limit = int(min(max(int(est * 1.25), 16 * 1024 * 1024), budget))

    kernel = _make_dense_relu_kernel(k_rem, use_scratch)
    scratch_shapes = ([pltpu.VMEM((tm, tn), jnp.float32)] if use_scratch else [])

    return pl.pallas_call(
        kernel,
        out_shape=jax.ShapeDtypeStruct((B, N), out_dtype),
        grid_spec=pltpu.PrefetchScalarGridSpec(
            num_scalar_prefetch=0,
            grid=grid,
            in_specs=[
                pl.BlockSpec((tm, tk), lambda i, j, k: (i, k)),   # x tile
                pl.BlockSpec((tn, tk), lambda i, j, k: (j, k)),   # weight tile
                pl.BlockSpec((1, tn), lambda i, j, k: (0, j)),    # bias tile
            ],
            out_specs=pl.BlockSpec((tm, tn), lambda i, j, k: (i, j)),
            scratch_shapes=scratch_shapes,
        ),
        compiler_params=pltpu.CompilerParams(
            dimension_semantics=("parallel", "parallel", "arbitrary"),
            vmem_limit_bytes=vmem_limit),
    )(x, weight, b2)


if __name__ == "__main__":
    latent_size = 32
    batch = 8

    key = jax.random.PRNGKey(0)
    kx, kw, kb = jax.random.split(key, 3)

    # Deterministic synthetic parameters (shapes per nn.Linear(latent, latent)).
    bound = 1.0 / (latent_size ** 0.5)
    weight = jax.random.uniform(kw, (latent_size, latent_size),
                                minval=-bound, maxval=bound, dtype=jnp.float32)
    bias = jax.random.uniform(kb, (latent_size,),
                              minval=-bound, maxval=bound, dtype=jnp.float32)
    x = jax.random.normal(kx, (batch, latent_size), dtype=jnp.float32)

    out = base_dense_module(x, weight, bias)
    out = jax.block_until_ready(out)

    # Reference check against plain JAX (same math as the PyTorch forward).
    ref = jnp.maximum(x @ weight.T + bias, 0.0)
    assert out.shape == (batch, latent_size)
    assert jnp.allclose(out, ref, atol=1e-5, rtol=1e-5)

    print("KERNEL_OK")
</pallas_src>

<mosaic_0001>
module attributes {stable_mosaic.version = 11 : i64} {
  func.func @kernel(%arg0: i32, %arg1: i32, %arg2: i32, %arg3: memref<8x32xf32, #tpu.memory_space<vmem>>, %arg4: memref<32x32xf32, #tpu.memory_space<vmem>>, %arg5: memref<1x32xf32, #tpu.memory_space<vmem>>, %arg6: memref<8x32xf32, #tpu.memory_space<vmem>>) attributes {dimension_semantics = [#tpu.dimension_semantics<parallel>, #tpu.dimension_semantics<parallel>, #tpu.dimension_semantics<arbitrary>], iteration_bounds = array<i64: 1, 1, 1>, scalar_prefetch = 0 : i64, scratch_operands = 0 : i64, tpu.core_type = #tpu.core_type<tc>, window_params = [{transform_indices = @transform_0, window_bounds = array<i64: 8, 32>}, {transform_indices = @transform_1, window_bounds = array<i64: 32, 32>}, {transform_indices = @transform_2, window_bounds = array<i64: 1, 32>}, {transform_indices = @transform_3, window_bounds = array<i64: 8, 32>}]} {
    %c0_i32 = arith.constant 0 : i32
    %0 = arith.cmpi eq, %arg2, %c0_i32 : i32
    %1 = arith.extui %0 : i1 to i32
    %c0_i32_0 = arith.constant 0 : i32
    %2 = arith.cmpi ne, %1, %c0_i32_0 : i32
    scf.if %2 {
      %cst_10 = arith.constant 0.000000e+00 : f32
      %12 = vector.broadcast %cst_10 : f32 to vector<8x32xf32>
      %c0_11 = arith.constant 0 : index
      %c0_12 = arith.constant 0 : index
      %13 = vector.load %arg6[%c0_11, %c0_12] : memref<8x32xf32, #tpu.memory_space<vmem>>, vector<8x32xf32>
      tpu.vector_store %arg6[%c0_11, %c0_12], %12 {strides = array<i32>} : memref<8x32xf32, #tpu.memory_space<vmem>>, vector<8x32xf32>,
    } else {
    }
    %c0 = arith.constant 0 : index
    %c0_1 = arith.constant 0 : index
    %3 = vector.load %arg3[%c0, %c0_1] : memref<8x32xf32, #tpu.memory_space<vmem>>, vector<8x32xf32>
    %c0_2 = arith.constant 0 : index
    %c0_3 = arith.constant 0 : index
    %4 = vector.load %arg4[%c0_2, %c0_3] : memref<32x32xf32, #tpu.memory_space<vmem>>, vector<32x32xf32>
    %c0_4 = arith.constant 0 : index
    %c0_5 = arith.constant 0 : index
    %5 = vector.load %arg6[%c0_4, %c0_5] : memref<8x32xf32, #tpu.memory_space<vmem>>, vector<8x32xf32>
    %cst = arith.constant dense<0.000000e+00> : vector<8x32xf32>
    %6 = tpu.matmul %3, %4, %cst {dimension_numbers = #tpu.dot_dimension_numbers<[1], [1], [0], [0], [0, 0, 1, 0], [], []>} : vector<8x32xf32>, vector<32x32xf32>, vector<8x32xf32> -> vector<8x32xf32>
    %7 = arith.addf %5, %6 : vector<8x32xf32>
    %c0_6 = arith.constant 0 : index
    %c0_7 = arith.constant 0 : index
    %8 = vector.load %arg6[%c0_6, %c0_7] : memref<8x32xf32, #tpu.memory_space<vmem>>, vector<8x32xf32>
    tpu.vector_store %arg6[%c0_6, %c0_7], %7 {strides = array<i32>} : memref<8x32xf32, #tpu.memory_space<vmem>>, vector<8x32xf32>,
    %c0_i32_8 = arith.constant 0 : i32
    %9 = arith.cmpi eq, %arg2, %c0_i32_8 : i32
    %10 = arith.extui %9 : i1 to i32
    %c0_i32_9 = arith.constant 0 : i32
    %11 = arith.cmpi ne, %10, %c0_i32_9 : i32
    scf.if %11 {
      %c0_10 = arith.constant 0 : index
      %c0_11 = arith.constant 0 : index
      %12 = vector.load %arg6[%c0_10, %c0_11] : memref<8x32xf32, #tpu.memory_space<vmem>>, vector<8x32xf32>
      %c0_12 = arith.constant 0 : index
      %c0_13 = arith.constant 0 : index
      %13 = vector.load %arg5[%c0_12, %c0_13] : memref<1x32xf32, #tpu.memory_space<vmem>>, vector<1x32xf32>
      %14 = vector.broadcast %13 : vector<1x32xf32> to vector<8x32xf32>
      %15 = arith.addf %12, %14 : vector<8x32xf32>
      %cst_14 = arith.constant 0.000000e+00 : f32
      %16 = vector.broadcast %cst_14 : f32 to vector<8x32xf32>
      %17 = arith.maximumf %15, %16 : vector<8x32xf32>
      %c0_15 = arith.constant 0 : index
      %c0_16 = arith.constant 0 : index
      %18 = vector.load %arg6[%c0_15, %c0_16] : memref<8x32xf32, #tpu.memory_space<vmem>>, vector<8x32xf32>
      tpu.vector_store %arg6[%c0_15, %c0_16], %17 {strides = array<i32>} : memref<8x32xf32, #tpu.memory_space<vmem>>, vector<8x32xf32>,
    } else {
    }
    return
  }
  func.func @transform_0(%arg0: i32, %arg1: i32, %arg2: i32) -> (i32, i32) {
    %c0_i32 = arith.constant 0 : i32
    return %arg0, %arg2 : i32, i32
  }
  func.func @transform_1(%arg0: i32, %arg1: i32, %arg2: i32) -> (i32, i32) {
    %c0_i32 = arith.constant 0 : i32
    return %arg1, %arg2 : i32, i32
  }
  func.func @transform_2(%arg0: i32, %arg1: i32, %arg2: i32) -> (i32, i32) {
    %c0_i32 = arith.constant 0 : i32
    %c0_i32_0 = arith.constant 0 : i32
    return %c0_i32, %arg1 : i32, i32
  }
  func.func @transform_3(%arg0: i32, %arg1: i32, %arg2: i32) -> (i32, i32) {
    %c0_i32 = arith.constant 0 : i32
    return %arg0, %arg1 : i32, i32
  }
}

</mosaic_0001>

<llo_original>
// kernel: tpu_custom_call.1
$region0: #{tpu_custom_call.1}
  #allocation0 [shape = 'u32[]', space=smem, size = 0x4, offset = 0x4, fixed_abs, tag = 'smem constant byte address 0x4 - core index']
  #allocation1 [shape = 'u32[72,128]{1,0:T(1,128)}', space=vmem, size = 0x9000, scoped, tag = 'internal scratch']
  %s0 = inlined_call_operand.hbm [shape: f32[8,32], index: 0, kind: input, shape index: {}]
  %s1 = inlined_call_operand.hbm [shape: f32[32,32], index: 1, kind: input, shape index: {}]
  %s2 = inlined_call_operand.vmem [shape: f32[1,32], index: 2, kind: input, shape index: {}]
  %s3 = inlined_call_operand.hbm [shape: f32[8,32], index: 3, kind: output, shape index: {}]
  %s4 = sld [smem:[#allocation0]]
  $region38: #{tpu_custom_call.1} parent=0
    _
  %s6 = ssub.s32 1, %s4
  %s7 = scalar_select 0, %s6, %s4
  $region1: #{tpu_custom_call.1} parent=0
    #allocation2 [shape = 'u8[4096]{0}', space=vmem, size = 0x1000, scoped, tag = 'input window, operand 0, single buffered']
    #allocation3 [shape = 's32[1]{0}', space=sflag, size = 0x4, scoped, tag = 'scoped memory for tpu_custom_call.1']
    #allocation4 [shape = 's32[1]{0}', space=sflag, size = 0x4, scoped, tag = 'scoped memory for tpu_custom_call.1']
    #allocation5 [shape = 'u8[16384]{0}', space=vmem, size = 0x4000, scoped, tag = 'input window, operand 1, single buffered']
    #allocation6 [shape = 's32[1]{0}', space=sflag, size = 0x4, scoped, tag = 'scoped memory for tpu_custom_call.1']
    #allocation7 [shape = 'u8[4096]{0}', space=vmem, size = 0x1000, scoped, tag = 'output window, operand 0, single buffered']
    %8 = vsyncpa [#allocation3], 0
    %9 = vsyncpa [#allocation6], 0
    %10 = vsyncpa [#allocation4], 0
    // Predicated region
    $region2: #{tpu_custom_call.1} parent=1 // pred_check
      _
    $region3: #{tpu_custom_call.1} parent=1 // pred_check_branch
      %12 = sbr.rel (0) target = $region5
    $region4: #{tpu_custom_call.1} parent=1 // pred_region
      %14 = vsyncadd [#allocation3], 0
      %s16 = sshll.u32 %s0, 4
      %s17 = int_to_ptr.hbm [resolvable:$true] %s16
      %s18 = sshll.u32 [#allocation2], 4
      %s19 = int_to_ptr.vmem [resolvable:$true] %s18
      %21 = dma.hbm_to_vmem [thread:$0]  %s17, 128, %s19, [#allocation3]
    $region5: #{tpu_custom_call.1} parent=1 // pred_fallthru
      _
    // Predicated region
    $region6: #{tpu_custom_call.1} parent=1 // pred_check
      _
    $region7: #{tpu_custom_call.1} parent=1 // pred_check_branch
      %23 = sbr.rel (0) target = $region9
    $region8: #{tpu_custom_call.1} parent=1 // pred_region
      %25 = vsyncadd [#allocation6], 0
      %s26 = sshll.u32 %s1, 4
      %s27 = int_to_ptr.hbm [resolvable:$true] %s26
      %s28 = sshll.u32 [#allocation5], 4
      %s29 = int_to_ptr.vmem [resolvable:$true] %s28
      %34 = dma.hbm_to_vmem [thread:$0]  %s27, 512, %s29, [#allocation6], 128, 128, 8
    $region9: #{tpu_custom_call.1} parent=1 // pred_fallthru
      _
    // Predicated region
    $region10: #{tpu_custom_call.1} parent=1 // pred_check
      _
    $region11: #{tpu_custom_call.1} parent=1 // pred_check_branch
      %36 = sbr.rel (0) target = $region13
    $region12: #{tpu_custom_call.1} parent=1 // pred_region
      _
    $region13: #{tpu_custom_call.1} parent=1 // pred_fallthru
      _
    // Predicated region
    $region14: #{tpu_custom_call.1} parent=1 // pred_check
      _
    $region15: #{tpu_custom_call.1} parent=1 // pred_check_branch
      %38 = sbr.rel (0) target = $region17
    $region16: #{tpu_custom_call.1} parent=1 // pred_region
      %40 = dma.done [#allocation3], 128
    $region17: #{tpu_custom_call.1} parent=1 // pred_fallthru
      _
    // Predicated region
    $region18: #{tpu_custom_call.1} parent=1 // pred_check
      _
    $region19: #{tpu_custom_call.1} parent=1 // pred_check_branch
      %42 = sbr.rel (0) target = $region21
    $region20: #{tpu_custom_call.1} parent=1 // pred_region
      %44 = dma.done [#allocation6], 512
    $region21: #{tpu_custom_call.1} parent=1 // pred_fallthru
      _
    %p45 = scmp.eq.s32.totalorder 0, 0
    // Predicated region
    $region22: #{tpu_custom_call.1} parent=1 // pred_check
      %p46 = pneg %p45
    $region23: #{tpu_custom_call.1} parent=1 // pred_check_branch
      %48 = sbr.rel (%p46) target = $region25
    $region24: #{tpu_custom_call.1} parent=1 // pred_region
      %vm49 = vcmask 261120
      %50 = vst.msk [vmem:[#allocation7] sm:$0xff] %vm49, 0.0
    $region25: #{tpu_custom_call.1} parent=1 // pred_fallthru
      _
    %v51 = vld [vmem:[#allocation2] sm:$0xff]
    %v52 = vld [vmem:[#allocation5] sm:$0xff]
    %v53 = vld [vmem:[#allocation5 + $0x8] sm:$0xff]
    %v54 = vld [vmem:[#allocation5 + $0x10] sm:$0xff]
    %v55 = vld [vmem:[#allocation5 + $0x18] sm:$0xff]
    %v56 = vld [vmem:[#allocation7] sm:$0xff]
    %vm57 = vcmask 261120
    %v59 = vsel %vm57, %v51, 0
    %v62 = vsel %vm57, %v52, 0
    %v65 = vsel %vm57, %v53, 0
    %v68 = vsel %vm57, %v54, 0
    %v71 = vsel %vm57, %v55, 0
    %73 = vmatpush.xpose.msra.mxu0 0.0
    %74 = vmatpush.xpose.msra.mxu0 0.0
    %75 = vmatpush.xpose.msra.mxu0 0.0
    %76 = vmatpush.xpose.msra.mxu0 0.0
    %77 = vmatpush.xpose.msra.mxu0 0.0
    %78 = vmatpush.xpose.msra.mxu0 0.0
    %79 = vmatpush.xpose.msra.mxu0 0.0
    %80 = vmatpush.xpose.msra.mxu0 0.0
    %81 = vmatpush.xpose.msra.mxu0 0.0
    %82 = vmatpush.xpose.msra.mxu0 0.0
    %83 = vmatpush.xpose.msra.mxu0 0.0
    %84 = vmatpush.xpose.msra.mxu0 0.0
    %85 = vmatpush.xpose.msra.mxu0 %v71
    %86 = vmatpush.xpose.msra.mxu0 %v68
    %87 = vmatpush.xpose.msra.mxu0 %v65
    %88 = vmatpush.xpose.msra.mxu0 %v62
    %89 = vmatmul.f32.gmra.mxu0 %v59
    %v90 = vpop.f32.mrf.mxu0
    %v91 = vadd.f32 0.0, %v90
    %92 = vdwg.mxu0
    %v93 = vadd.f32 %v56, %v91
    %94 = vst.msk [vmem:[#allocation7] sm:$0xff] %vm57, %v93
    // Predicated region
    $region26: #{tpu_custom_call.1} parent=1 // pred_check
      %p95 = pneg %p45
    $region27: #{tpu_custom_call.1} parent=1 // pred_check_branch
      %97 = sbr.rel (%p95) target = $region29
    $region28: #{tpu_custom_call.1} parent=1 // pred_region
      %v98 = vld [vmem:[#allocation7] sm:$0xff]
      %v99 = vld [vmem:[%s2] sm:$0x1]
      %v101 = vperm.slane %v99, 0
      %v103 = vadd.f32 %v98, %v101
      %v104 = vmax.f32 %v103, 0.0
      %105 = vst.msk [vmem:[#allocation7] sm:$0xff] %vm57, %v104
    $region29: #{tpu_custom_call.1} parent=1 // pred_fallthru
      _
    // Predicated region
    $region30: #{tpu_custom_call.1} parent=1 // pred_check
      _
    $region31: #{tpu_custom_call.1} parent=1 // pred_check_branch
      %107 = sbr.rel (0) target = $region33
    $region32: #{tpu_custom_call.1} parent=1 // pred_region
      %109 = vsyncadd [#allocation4], 0
      %s111 = sshll.u32 [#allocation7], 4
      %s112 = int_to_ptr.vmem [resolvable:$true] %s111
      %s113 = sshll.u32 %s3, 4
      %s114 = int_to_ptr.hbm [resolvable:$true] %s113
      %116 = dma.vmem_to_hbm [thread:$0]  %s112, 128, %s114, [#allocation4]
    $region33: #{tpu_custom_call.1} parent=1 // pred_fallthru
      _
    // Predicated region
    $region34: #{tpu_custom_call.1} parent=1 // pred_check
      _
    $region35: #{tpu_custom_call.1} parent=1 // pred_check_branch
      %118 = sbr.rel (0) target = $region37
    $region36: #{tpu_custom_call.1} parent=1 // pred_region
      %120 = dma.done [#allocation4], 128
    $region37: #{tpu_custom_call.1} parent=1 // pred_fallthru
      _
    %121 = vsyncpa [#allocation3], 1
    %122 = vsyncpa [#allocation6], 1
    %123 = vsyncpa [#allocation4], 1

</llo_original>
